<compile_context>
chip_gen: v6e
topology: v6e:2x2x1
jax: 0.10.0
libtpu: 0.0.40
codegen_flags: <defaults>
</compile_context>

<pallas_src>
import jax
import jax.numpy as jnp
from jax import lax
from jax.experimental import pallas as pl
from jax.experimental.pallas import tpu as pltpu

_LANES = 128
_SUB = 8  # row-chunk processed per inner-loop step (one f32 vreg of sublanes)


def _make_loss_kernel(rows_tile, tiles_per_core, total_rows, needs_mask):
    n_full = rows_tile // _SUB
    tail = rows_tile % _SUB   # only possible when rows_tile == R < sublane gran

    def kernel(x_ref, d_ref, sq_ref, row_ref):
        c = pl.program_id(0)          # parallel (TensorCore) axis
        t = pl.program_id(1)          # arbitrary (streaming/reduction) axis

        @pl.when(t == 0)
        def _init():
            sq_ref[...] = jnp.zeros_like(sq_ref)
            row_ref[...] = jnp.zeros_like(row_ref)

        # First global row of this block (from program ids, NOT the clamped
        # index_map), so duplicated / out-of-bounds rows are masked to zero.
        row0 = (c * tiles_per_core + t) * rows_tile

        def partials(r_off, n_rows):
            x = x_ref[:, pl.ds(r_off, n_rows), :].astype(jnp.float32)
            d = d_ref[:, pl.ds(r_off, n_rows), :].astype(jnp.float32)
            if needs_mask:
                rows = row0 + r_off + lax.broadcasted_iota(
                    jnp.int32, (n_rows, _LANES), 0)
                keep = rows < total_rows
                diff = jnp.where(keep, x - d, 0.0)
                xs = jnp.where(keep, x, 0.0)
            else:
                diff = x - d
                xs = x
            # (n_rows,128) squared-diff partial (summed over batch, pure VPU)
            # and the (B,n_rows,128) per-image row partial.
            return jnp.sum(diff * diff, axis=0), xs

        if n_full > 0:
            def body(i, carry):
                off = pl.multiple_of(i * _SUB, _SUB)
                sq_p, row_p = partials(off, _SUB)
                sq_ref[0] += sq_p
                row_ref[0] += row_p
                return carry
            lax.fori_loop(0, n_full, body, 0, unroll=min(8, n_full))

        if tail > 0:
            sq_p, row_p = partials(n_full * _SUB, tail)
            sq_ref[0, :tail, :] += sq_p
            row_ref[0, :, :tail, :] += row_p

    return kernel


def combined_loss(logits, batch_dmap, batch_gts,
                  weight_dmap: float = 0.8, weight_sum_gt: float = 0.2,
                  target_block_bytes: int = 3 << 19):
    B, C, H, W = logits.shape
    assert C == 1, "CombinedLoss squeeze() semantics assume a single-channel density map"
    assert batch_dmap.shape == logits.shape
    HW = C * H * W
    R = pl.cdiv(HW, _LANES)

    # Keep the original dtype on the two big streams (bf16 reads half the HBM
    # bytes); casting to f32 happens per chunk inside the kernel.
    lf = logits.reshape(B, HW)
    df = batch_dmap.reshape(B, HW)
    if R * _LANES != HW:
        # Pad only to the next multiple of 128 so the (B, R, 128) view is free.
        # Zeros are exact (contribute 0 to both sums); true counts normalise.
        # TODO(synk): drop even this copy by keeping a (B, HW) layout with an
        # in-kernel lane mask (at the cost of sublane density for small B).
        pad = R * _LANES - HW
        lf = jnp.pad(lf, ((0, 0), (0, pad)))
        df = jnp.pad(df, ((0, 0), (0, pad)))
    lf = lf.reshape(B, R, _LANES)
    df = df.reshape(B, R, _LANES)

    # ---- block sizing: budget bytes per step, not lane counts ---------------
    it_l = jnp.dtype(logits.dtype).itemsize
    it_d = jnp.dtype(batch_dmap.dtype).itemsize
    gran = max(_SUB, 32 // min(it_l, it_d))          # 8 f32 / 16 bf16 / 32 int8
    row_bytes = B * _LANES * max(it_l, it_d)
    if R < gran:
        rows_tile = R                                 # block dim == full array dim
    else:
        want = max(gran, target_block_bytes // row_bytes)
        rows_tile = max(gran, min((want // gran) * gran, (R // gran) * gran))

    n_tiles = pl.cdiv(R, rows_tile)
    num_cores = 2 if n_tiles >= 2 else 1              # v7x 2-TC split; harmless on 1-TC
    tiles_per_core = pl.cdiv(n_tiles, num_cores)
    covered_rows = num_cores * tiles_per_core * rows_tile
    needs_mask = covered_rows > R

    # VMEM budget: 2 inputs x 2 pipeline buffers + resident partial outputs.
    block_bytes = B * rows_tile * _LANES * (it_l + it_d)
    out_bytes = 4 * _SUB * _LANES * (1 + B)
    vmem_need = 2 * block_bytes + 2 * out_bytes + (2 << 20)
    vmem_limit = int(min(max(vmem_need, 32 << 20), 48 << 20))

    def in_map(c, t):
        # Clamp so a possible extra tile (odd n_tiles split over 2 cores)
        # re-reads a valid block instead of DMA-ing fully out of bounds; the
        # kernel masks its contribution to zero via program ids.
        return (0, jnp.minimum(c * tiles_per_core + t, n_tiles - 1), 0)

    kernel = _make_loss_kernel(rows_tile, tiles_per_core, R, needs_mask)

    sq_part, row_part = pl.pallas_call(
        kernel,
        out_shape=(
            jax.ShapeDtypeStruct((num_cores, _SUB, _LANES), jnp.float32),
            jax.ShapeDtypeStruct((num_cores, B, _SUB, _LANES), jnp.float32),
        ),
        grid=(num_cores, tiles_per_core),
        in_specs=[
            pl.BlockSpec((B, rows_tile, _LANES), in_map),
            pl.BlockSpec((B, rows_tile, _LANES), in_map),
        ],
        out_specs=(
            pl.BlockSpec((1, _SUB, _LANES), lambda c, t: (c, 0, 0)),
            pl.BlockSpec((1, B, _SUB, _LANES), lambda c, t: (c, 0, 0, 0)),
        ),
        compiler_params=pltpu.CompilerParams(
            dimension_semantics=("parallel", "arbitrary"),
            vmem_limit_bytes=vmem_limit),
    )(lf, df)

    # Tiny finalisation on (cores,8,128)/(cores,B,8,128) partials in the
    # wrapper, so each TensorCore only ever writes its own output block.
    gts = batch_gts.astype(jnp.float32).reshape(B)
    mse = jnp.sum(sq_part) / jnp.float32(B * HW)
    row_sums = jnp.sum(row_part, axis=(0, 2, 3))           # per-image sums, (B,)
    mae = jnp.mean(jnp.abs(row_sums - gts))
    combined = jnp.float32(weight_dmap) * mse + jnp.float32(weight_sum_gt) * mae
    return combined, mae


def _reference(logits, batch_dmap, batch_gts, wd=0.8, ws=0.2):
    l = logits.astype(jnp.float32)
    d = batch_dmap.astype(jnp.float32)
    g = batch_gts.astype(jnp.float32)
    img_loss = jnp.mean((l - d) ** 2)
    logits_sum = jnp.squeeze(jnp.sum(l, axis=(2, 3)))
    mae = jnp.mean(jnp.abs(logits_sum - g))
    return wd * img_loss + ws * mae, mae


if __name__ == "__main__":
    key = jax.random.PRNGKey(0)
    ks = jax.random.split(key, 12)

    def check(name, logits, dmap, gts, tol, **kw):
        comb, mae = jax.block_until_ready(combined_loss(logits, dmap, gts, **kw))
        rc, rm = _reference(logits, dmap, gts)
        assert jnp.allclose(comb, rc, rtol=tol, atol=tol), (name, comb, rc)
        assert jnp.allclose(mae, rm, rtol=tol, atol=tol), (name, mae, rm)

    # 1) f32, HW multiple of 128, small single-tile path.
    B, C, H, W = 2, 1, 16, 16
    check("f32_small",
          jax.random.normal(ks[0], (B, C, H, W), jnp.float32),
          jax.random.normal(ks[1], (B, C, H, W), jnp.float32),
          jax.random.uniform(ks[2], (B,), jnp.float32) * 100.0,
          1e-5)

    # 2) f32, forced small blocks -> multi-tile accumulation + 2-way core split.
    B, H, W = 2, 64, 64                 # R = 32, rows_tile forced to 8 -> grid (2, 2)
    check("f32_multitile",
          jax.random.normal(ks[3], (B, 1, H, W), jnp.float32),
          jax.random.normal(ks[4], (B, 1, H, W), jnp.float32),
          jax.random.uniform(ks[5], (B,), jnp.float32) * 100.0,
          1e-5, target_block_bytes=B * _LANES * 4 * _SUB)

    # 3) f32, HW not a multiple of 128 and R not a multiple of the row tile ->
    #    exercises the 128-pad path AND the in-kernel ragged-row mask.
    B, H, W = 2, 40, 40                 # HW = 1600, R = 13, rows_tile = 8, masked tail
    check("f32_masked",
          jax.random.normal(ks[6], (B, 1, H, W), jnp.float32),
          jax.random.normal(ks[7], (B, 1, H, W), jnp.float32),
          jax.random.uniform(ks[8], (B,), jnp.float32) * 100.0,
          1e-5, target_block_bytes=B * _LANES * 4 * _SUB)

    # 4) bf16 streams (in-kernel upcast), HW not a multiple of 128, odd batch,
    #    single short tile (tail chunk < 8 rows).
    B, H, W = 3, 20, 20                 # HW = 400, R = 4
    check("bf16_tail",
          jax.random.normal(ks[9], (B, 1, H, W), jnp.bfloat16),
          jax.random.normal(ks[10], (B, 1, H, W), jnp.bfloat16),
          jax.random.uniform(ks[11], (B,), jnp.float32) * 100.0,
          1e-4)

    print("KERNEL_OK")
</pallas_src>

<mosaic_0001>
module attributes {stable_mosaic.version = 11 : i64} {
  func.func @kernel(%arg0: i32, %arg1: i32, %arg2: memref<2x2x128xf32, #tpu.memory_space<vmem>>, %arg3: memref<2x2x128xf32, #tpu.memory_space<vmem>>, %arg4: memref<1x8x128xf32, #tpu.memory_space<vmem>>, %arg5: memref<1x2x8x128xf32, #tpu.memory_space<vmem>>) attributes {dimension_semantics = [#tpu.dimension_semantics<parallel>, #tpu.dimension_semantics<arbitrary>], iteration_bounds = array<i64: 1, 1>, scalar_prefetch = 0 : i64, scratch_operands = 0 : i64, tpu.core_type = #tpu.core_type<tc>, window_params = [{transform_indices = @transform_0, window_bounds = array<i64: 2, 2, 128>}, {transform_indices = @transform_1, window_bounds = array<i64: 2, 2, 128>}, {transform_indices = @transform_2, window_bounds = array<i64: 1, 8, 128>}, {transform_indices = @transform_3, window_bounds = array<i64: 1, 2, 8, 128>}]} {
    %c0_i32 = arith.constant 0 : i32
    %0 = arith.cmpi eq, %arg1, %c0_i32 : i32
    %1 = arith.extui %0 : i1 to i32
    %c0_i32_0 = arith.constant 0 : i32
    %2 = arith.cmpi ne, %1, %c0_i32_0 : i32
    scf.if %2 {
      %cst_20 = arith.constant 0.000000e+00 : f32
      %20 = vector.broadcast %cst_20 : f32 to vector<1x8x128xf32>
      %c0_21 = arith.constant 0 : index
      %c0_22 = arith.constant 0 : index
      %c0_23 = arith.constant 0 : index
      %21 = vector.load %arg4[%c0_21, %c0_22, %c0_23] : memref<1x8x128xf32, #tpu.memory_space<vmem>>, vector<1x8x128xf32>
      tpu.vector_store %arg4[%c0_21, %c0_22, %c0_23], %20 {strides = array<i32>} : memref<1x8x128xf32, #tpu.memory_space<vmem>>, vector<1x8x128xf32>,
      %cst_24 = arith.constant 0.000000e+00 : f32
      %22 = vector.broadcast %cst_24 : f32 to vector<1x2x8x128xf32>
      %c0_25 = arith.constant 0 : index
      %c0_26 = arith.constant 0 : index
      %c0_27 = arith.constant 0 : index
      %c0_28 = arith.constant 0 : index
      %23 = vector.load %arg5[%c0_25, %c0_26, %c0_27, %c0_28] : memref<1x2x8x128xf32, #tpu.memory_space<vmem>>, vector<1x2x8x128xf32>
      tpu.vector_store %arg5[%c0_25, %c0_26, %c0_27, %c0_28], %22 {strides = array<i32>} : memref<1x2x8x128xf32, #tpu.memory_space<vmem>>, vector<1x2x8x128xf32>,
    } else {
    }
    %c0 = arith.constant 0 : index
    %c0_1 = arith.constant 0 : index
    %c0_2 = arith.constant 0 : index
    %3 = vector.load %arg2[%c0, %c0_1, %c0_2] : memref<2x2x128xf32, #tpu.memory_space<vmem>>, vector<2x2x128xf32>
    %c0_3 = arith.constant 0 : index
    %c0_4 = arith.constant 0 : index
    %c0_5 = arith.constant 0 : index
    %4 = vector.load %arg3[%c0_3, %c0_4, %c0_5] : memref<2x2x128xf32, #tpu.memory_space<vmem>>, vector<2x2x128xf32>
    %5 = arith.subf %3, %4 : vector<2x2x128xf32>
    %6 = arith.mulf %5, %5 : vector<2x2x128xf32>
    %cst = arith.constant dense<0.000000e+00> : vector<2x128xf32>
    %7 = vector.multi_reduction <add>, %6, %cst [0] : vector<2x2x128xf32> to vector<2x128xf32>
    %c0_6 = arith.constant 0 : index
    %c0_7 = arith.constant 0 : index
    %c0_8 = arith.constant 0 : index
    %8 = vector.load %arg4[%c0_6, %c0_7, %c0_8] : memref<1x8x128xf32, #tpu.memory_space<vmem>>, vector<1x2x128xf32>
    %9 = vector.shape_cast %8 : vector<1x2x128xf32> to vector<2x128xf32>
    %10 = arith.addf %9, %7 : vector<2x128xf32>
    %c0_9 = arith.constant 0 : index
    %c0_10 = arith.constant 0 : index
    %c0_11 = arith.constant 0 : index
    %11 = vector.load %arg4[%c0_9, %c0_10, %c0_11] : memref<1x8x128xf32, #tpu.memory_space<vmem>>, vector<1x2x128xf32>
    %12 = vector.shape_cast %11 : vector<1x2x128xf32> to vector<2x128xf32>
    %13 = vector.shape_cast %10 : vector<2x128xf32> to vector<1x2x128xf32>
    tpu.vector_store %arg4[%c0_9, %c0_10, %c0_11], %13 {strides = array<i32>} : memref<1x8x128xf32, #tpu.memory_space<vmem>>, vector<1x2x128xf32>,
    %c0_12 = arith.constant 0 : index
    %c0_13 = arith.constant 0 : index
    %c0_14 = arith.constant 0 : index
    %c0_15 = arith.constant 0 : index
    %14 = vector.load %arg5[%c0_12, %c0_13, %c0_14, %c0_15] : memref<1x2x8x128xf32, #tpu.memory_space<vmem>>, vector<1x2x2x128xf32>
    %15 = vector.shape_cast %14 : vector<1x2x2x128xf32> to vector<2x2x128xf32>
    %16 = arith.addf %15, %3 : vector<2x2x128xf32>
    %c0_16 = arith.constant 0 : index
    %c0_17 = arith.constant 0 : index
    %c0_18 = arith.constant 0 : index
    %c0_19 = arith.constant 0 : index
    %17 = vector.load %arg5[%c0_16, %c0_17, %c0_18, %c0_19] : memref<1x2x8x128xf32, #tpu.memory_space<vmem>>, vector<1x2x2x128xf32>
    %18 = vector.shape_cast %17 : vector<1x2x2x128xf32> to vector<2x2x128xf32>
    %19 = vector.shape_cast %16 : vector<2x2x128xf32> to vector<1x2x2x128xf32>
    tpu.vector_store %arg5[%c0_16, %c0_17, %c0_18, %c0_19], %19 {strides = array<i32>} : memref<1x2x8x128xf32, #tpu.memory_space<vmem>>, vector<1x2x2x128xf32>,
    return
  }
  func.func @transform_0(%arg0: i32, %arg1: i32) -> (i32, i32, i32) {
    %c1_i32 = arith.constant 1 : i32
    %0 = arith.muli %arg0, %c1_i32 : i32
    %1 = arith.addi %0, %arg1 : i32
    %c0_i32 = arith.constant 0 : i32
    %2 = arith.minsi %1, %c0_i32 : i32
    %c0_i32_0 = arith.constant 0 : i32
    %c0_i32_1 = arith.constant 0 : i32
    %c0_i32_2 = arith.constant 0 : i32
    return %c0_i32_0, %2, %c0_i32_1 : i32, i32, i32
  }
  func.func @transform_1(%arg0: i32, %arg1: i32) -> (i32, i32, i32) {
    %c1_i32 = arith.constant 1 : i32
    %0 = arith.muli %arg0, %c1_i32 : i32
    %1 = arith.addi %0, %arg1 : i32
    %c0_i32 = arith.constant 0 : i32
    %2 = arith.minsi %1, %c0_i32 : i32
    %c0_i32_0 = arith.constant 0 : i32
    %c0_i32_1 = arith.constant 0 : i32
    %c0_i32_2 = arith.constant 0 : i32
    return %c0_i32_0, %2, %c0_i32_1 : i32, i32, i32
  }
  func.func @transform_2(%arg0: i32, %arg1: i32) -> (i32, i32, i32) {
    %c0_i32 = arith.constant 0 : i32
    %c0_i32_0 = arith.constant 0 : i32
    %c0_i32_1 = arith.constant 0 : i32
    return %arg0, %c0_i32, %c0_i32_0 : i32, i32, i32
  }
  func.func @transform_3(%arg0: i32, %arg1: i32) -> (i32, i32, i32, i32) {
    %c0_i32 = arith.constant 0 : i32
    %c0_i32_0 = arith.constant 0 : i32
    %c0_i32_1 = arith.constant 0 : i32
    %c0_i32_2 = arith.constant 0 : i32
    return %arg0, %c0_i32, %c0_i32_0, %c0_i32_1 : i32, i32, i32, i32
  }
}

</mosaic_0001>

<llo_original>
// kernel: tpu_custom_call.1
$region0: #{tpu_custom_call.1}
  #allocation0 [shape = 'u32[]', space=smem, size = 0x4, offset = 0x4, fixed_abs, tag = 'smem constant byte address 0x4 - core index']
  #allocation1 [shape = 'u32[144,128]{1,0:T(1,128)}', space=vmem, size = 0x12000, scoped, tag = 'internal scratch']
  %s0 = inlined_call_operand.hbm [shape: f32[2,2,128], index: 0, kind: input, shape index: {}]
  %s1 = inlined_call_operand.hbm [shape: f32[2,2,128], index: 1, kind: input, shape index: {}]
  %s2 = inlined_call_operand.hbm [shape: f32[1,8,128], index: 2, kind: output, shape index: {0}]
  %s3 = inlined_call_operand.hbm [shape: f32[1,2,8,128], index: 3, kind: output, shape index: {1}]
  %4 = xla_tuple %s2, %s3
  %s5 = sld [smem:[#allocation0]]
  $region38: #{tpu_custom_call.1} parent=0
    _
  %s7 = ssub.s32 1, %s5
  %s8 = scalar_select 0, %s7, %s5
  $region1: #{tpu_custom_call.1} parent=0
    #allocation2 [shape = 'u8[2048]{0}', space=vmem, size = 0x800, scoped, tag = 'input window, operand 0, single buffered']
    #allocation3 [shape = 's32[1]{0}', space=sflag, size = 0x4, scoped, tag = 'scoped memory for tpu_custom_call.1']
    #allocation4 [shape = 's32[1]{0}', space=sflag, size = 0x4, scoped, tag = 'scoped memory for tpu_custom_call.1']
    #allocation5 [shape = 'u8[2048]{0}', space=vmem, size = 0x800, scoped, tag = 'input window, operand 1, single buffered']
    #allocation6 [shape = 's32[1]{0}', space=sflag, size = 0x4, scoped, tag = 'scoped memory for tpu_custom_call.1']
    #allocation7 [shape = 'u8[4096]{0}', space=vmem, size = 0x1000, scoped, tag = 'output window, operand 0, single buffered']
    #allocation8 [shape = 'u8[8192]{0}', space=vmem, size = 0x2000, scoped, tag = 'output window, operand 1, single buffered']
    #allocation9 [shape = 's32[1]{0}', space=sflag, size = 0x4, scoped, tag = 'scoped memory for tpu_custom_call.1']
    %9 = vsyncpa [#allocation3], 0
    %10 = vsyncpa [#allocation6], 0
    %11 = vsyncpa [#allocation4], 0
    %12 = vsyncpa [#allocation9], 0
    // Predicated region
    $region2: #{tpu_custom_call.1} parent=1 // pred_check
      _
    $region3: #{tpu_custom_call.1} parent=1 // pred_check_branch
      %14 = sbr.rel (0) target = $region5
    $region4: #{tpu_custom_call.1} parent=1 // pred_region
      %s15 = sadd.s32 0, 0
      %p16 = scmp.lt.s32.totalorder %s15, 0
      %s17 = scalar_select %p16, %s15, 0
      %s19 = ssub.s32 64, 64
      %20 = vsyncadd [#allocation3], %s19
      %s21 = smul.addr %s17, 32
      %s22 = scalar_lea.hbm %s0, %s21
      %s23 = sshll.u32 [#allocation2], 4
      %s24 = int_to_ptr.vmem [resolvable:$true] %s23
      %29 = dma.hbm_to_vmem [thread:$0]  %s22, 64, %s24, [#allocation3], 32, 32, 2
    $region5: #{tpu_custom_call.1} parent=1 // pred_fallthru
      _
    // Predicated region
    $region6: #{tpu_custom_call.1} parent=1 // pred_check
      _
    $region7: #{tpu_custom_call.1} parent=1 // pred_check_branch
      %31 = sbr.rel (0) target = $region9
    $region8: #{tpu_custom_call.1} parent=1 // pred_region
      %s32 = sadd.s32 0, 0
      %p33 = scmp.lt.s32.totalorder %s32, 0
      %s34 = scalar_select %p33, %s32, 0
      %s36 = ssub.s32 64, 64
      %37 = vsyncadd [#allocation6], %s36
      %s38 = smul.addr %s34, 32
      %s39 = scalar_lea.hbm %s1, %s38
      %s40 = sshll.u32 [#allocation5], 4
      %s41 = int_to_ptr.vmem [resolvable:$true] %s40
      %46 = dma.hbm_to_vmem [thread:$0]  %s39, 64, %s41, [#allocation6], 32, 32, 2
    $region9: #{tpu_custom_call.1} parent=1 // pred_fallthru
      _
    // Predicated region
    $region10: #{tpu_custom_call.1} parent=1 // pred_check
      _
    $region11: #{tpu_custom_call.1} parent=1 // pred_check_branch
      %48 = sbr.rel (0) target = $region13
    $region12: #{tpu_custom_call.1} parent=1 // pred_region
      %49 = dma.done [#allocation3], 64
    $region13: #{tpu_custom_call.1} parent=1 // pred_fallthru
      _
    // Predicated region
    $region14: #{tpu_custom_call.1} parent=1 // pred_check
      _
    $region15: #{tpu_custom_call.1} parent=1 // pred_check_branch
      %51 = sbr.rel (0) target = $region17
    $region16: #{tpu_custom_call.1} parent=1 // pred_region
      %52 = dma.done [#allocation6], 64
    $region17: #{tpu_custom_call.1} parent=1 // pred_fallthru
      _
    %s53 = sadd.s32 0, 0
    %p54 = scmp.lt.s32.totalorder %s53, 0
    %s55 = scalar_select %p54, %s53, 0
    %s56 = sadd.s32 0, 0
    %p57 = scmp.lt.s32.totalorder %s56, 0
    %s58 = scalar_select %p57, %s56, 0
    %p59 = scmp.eq.s32.totalorder 0, 0
    // Predicated region
    $region18: #{tpu_custom_call.1} parent=1 // pred_check
      %p60 = pneg %p59
    $region19: #{tpu_custom_call.1} parent=1 // pred_check_branch
      %62 = sbr.rel (%p60) target = $region21
    $region20: #{tpu_custom_call.1} parent=1 // pred_region
      %63 = vst [vmem:[#allocation7] sm:$0xff] 0.0
      %64 = vst [vmem:[#allocation8] sm:$0xff] 0.0
      %65 = vst [vmem:[#allocation8 + $0x8] sm:$0xff] 0.0
    $region21: #{tpu_custom_call.1} parent=1 // pred_fallthru
      _
    %v66 = vld [vmem:[#allocation2] sm:$0x3]
    %v67 = vld [vmem:[#allocation2 + $0x2] sm:$0x3]
    %v68 = vld [vmem:[#allocation5] sm:$0x3]
    %v69 = vld [vmem:[#allocation5 + $0x2] sm:$0x3]
    %v70 = vsub.f32 %v66, %v68
    %v71 = vsub.f32 %v67, %v69
    %v72 = vmul.f32 %v70, %v70
    %v73 = vmul.f32 %v71, %v71
    %vm74 = vcmask 1041408
    %v75 = vsel %vm74, %v72, 0.0
    %v76 = vsel %vm74, %v73, 0.0
    %v77 = vadd.f32 %v75, %v76
    %v78 = vld [vmem:[#allocation7] sm:$0x3]
    %v79 = vadd.f32 %v78, %v77
    %80 = vst [vmem:[#allocation7] sm:$0x3] %v79
    %v81 = vld [vmem:[#allocation8] sm:$0x3]
    %v82 = vld [vmem:[#allocation8 + $0x8] sm:$0x3]
    %v83 = vadd.f32 %v81, %v66
    %v84 = vadd.f32 %v82, %v67
    %85 = vst [vmem:[#allocation8] sm:$0x3] %v83
    %86 = vst [vmem:[#allocation8 + $0x8] sm:$0x3] %v84
    // Predicated region
    $region22: #{tpu_custom_call.1} parent=1 // pred_check
      _
    $region23: #{tpu_custom_call.1} parent=1 // pred_check_branch
      %88 = sbr.rel (0) target = $region25
    $region24: #{tpu_custom_call.1} parent=1 // pred_region
      %s90 = ssub.s32 128, 128
      %91 = vsyncadd [#allocation4], %s90
      %s93 = sshll.u32 [#allocation7], 4
      %s94 = int_to_ptr.vmem [resolvable:$true] %s93
      %96 = dma.vmem_to_hbm [thread:$0]  %s94, 128, %s2, [#allocation4]
    $region25: #{tpu_custom_call.1} parent=1 // pred_fallthru
      _
    // Predicated region
    $region26: #{tpu_custom_call.1} parent=1 // pred_check
      _
    $region27: #{tpu_custom_call.1} parent=1 // pred_check_branch
      %98 = sbr.rel (0) target = $region29
    $region28: #{tpu_custom_call.1} parent=1 // pred_region
      %s100 = ssub.s32 256, 256
      %101 = vsyncadd [#allocation9], %s100
      %s102 = sshll.u32 [#allocation8], 4
      %s103 = int_to_ptr.vmem [resolvable:$true] %s102
      %108 = dma.vmem_to_hbm [thread:$0]  %s103, 256, %s3, [#allocation9], 128, 128, 8
    $region29: #{tpu_custom_call.1} parent=1 // pred_fallthru
      _
    // Predicated region
    $region30: #{tpu_custom_call.1} parent=1 // pred_check
      _
    $region31: #{tpu_custom_call.1} parent=1 // pred_check_branch
      %110 = sbr.rel (0) target = $region33
    $region32: #{tpu_custom_call.1} parent=1 // pred_region
      %111 = dma.done [#allocation4], 128
    $region33: #{tpu_custom_call.1} parent=1 // pred_fallthru
      _
    // Predicated region
    $region34: #{tpu_custom_call.1} parent=1 // pred_check
      _
    $region35: #{tpu_custom_call.1} parent=1 // pred_check_branch
      %113 = sbr.rel (0) target = $region37
    $region36: #{tpu_custom_call.1} parent=1 // pred_region
      %114 = dma.done [#allocation9], 256
    $region37: #{tpu_custom_call.1} parent=1 // pred_fallthru
      _
    %115 = vsyncpa [#allocation3], 1
    %116 = vsyncpa [#allocation6], 1
    %117 = vsyncpa [#allocation4], 1
    %118 = vsyncpa [#allocation9], 1

</llo_original>
